<compile_context>
chip_gen: v7x
topology: tpu7x:2x2x1
jax: 0.10.0
libtpu: 0.0.40
codegen_flags: <defaults>
</compile_context>

<pallas_src>
import functools

import jax
import jax.numpy as jnp
import numpy as np
from jax import lax
from jax.experimental import pallas as pl
from jax.experimental.pallas import tpu as pltpu

_BN_EPS = 1e-5
_LANES = 128                       # vreg lane width / folded slab width
_LHS_BLOCK_BUDGET = 6 * 1024 * 1024  # per-buffer LHS tile budget (bytes)

ARCHITECTURE = [['conv', 16, 3], ['conv', 16, 3], ['max_pooling', 2, 2],
                ['conv', 32, 3], ['res', 32, 3], ['max_pooling', 2, 2],
                ['conv', 64, 3], ['res', 64, 3], ['res', 64, 3],
                ['max_pooling', 2, 2], ['res', 64, 3], ['res', 64, 3],
                ['max_pooling', 2, 2], ['conv', 128, 3], ['res', 128, 3],
                ['res', 128, 3], ['detection', 3]]


# --------------------------- Pallas kernels ----------------------------------

def _conv_pass1_kernel(x_ref, w_ref, y_ref, stats_ref):
    """Pass 1: folded conv-as-matmul on one slab tile + per-tile BN partials.

    x_ref     : (tile_s, F*K_pad) bf16  folded im2col rows (F spatial rows / slab)
    w_ref     : (F*K_pad, L)      bf16  block-diagonal weights, grid-resident
    y_ref     : (tile_s, L)       bf16  pre-BN conv output (lane = f*Cout + c)
    stats_ref : (1, 8, L)         f32   sublane 0 = sum(y), sublane 1 = sum(y*y)
    """
    y = jnp.dot(x_ref[...], w_ref[...], preferred_element_type=jnp.float32)
    y_ref[...] = y.astype(y_ref.dtype)
    s = jnp.sum(y, axis=0, keepdims=True)          # (1, L), f32
    ss = jnp.sum(y * y, axis=0, keepdims=True)     # (1, L), f32
    row = lax.broadcasted_iota(jnp.int32, (8, y.shape[1]), 0)
    stats_ref[0, :, :] = (jnp.where(row == 0, s, 0.0) +
                          jnp.where(row == 1, ss, 0.0))


def _bn_act_kernel(y_ref, scale_ref, shift_ref, out_ref, *, apply_relu):
    """Pass 2: y*scale + shift (+ ReLU) on one slab tile; bf16 out."""
    t = y_ref[...].astype(jnp.float32) * scale_ref[...] + shift_ref[...]
    if apply_relu:
        t = jnp.maximum(t, 0.0)
    out_ref[...] = t.astype(out_ref.dtype)


def _bn_act_res_kernel(y_ref, scale_ref, shift_ref, res_ref, out_ref, *, apply_relu):
    """Pass 2 with fused residual add (ResidualBlock tail) + ReLU."""
    t = (y_ref[...].astype(jnp.float32) * scale_ref[...] + shift_ref[...]
         + res_ref[...].astype(jnp.float32))
    if apply_relu:
        t = jnp.maximum(t, 0.0)
    out_ref[...] = t.astype(out_ref.dtype)


# ------------------------------- helpers --------------------------------------

def _round_up(x: int, m: int) -> int:
    return ((x + m - 1) // m) * m


@functools.lru_cache(maxsize=None)
def _chip_constants():
    """Per-generation (vmem_limit_bytes, target slab-rows per grid step)."""
    try:
        vmem = int(pltpu.get_tpu_info().vmem_capacity_bytes)
    except Exception:
        vmem = None
    if vmem is None:
        return 32 * 1024 * 1024, 1024            # conservative fallback (v7x-safe)
    if vmem >= 100 * 1024 * 1024:                # v5e / v6e: 128 MiB physical VMEM
        return 96 * 1024 * 1024, 2048
    return 32 * 1024 * 1024, 2048                # v7x: 64 MiB physical VMEM


def _mosaic_params():
    vmem_limit, _ = _chip_constants()
    return pltpu.CompilerParams(dimension_semantics=("parallel",),
                                vmem_limit_bytes=vmem_limit)


def _pick_tiling(S: int, lhs_row_bytes: int):
    """Slab-row tile (multiple of 16, VMEM-capped) and the padded slab count."""
    _, target = _chip_constants()
    cap = max(16, (_LHS_BLOCK_BUDGET // max(lhs_row_bytes, 1)) // 16 * 16)
    t_max = max(16, min(target, cap))
    num_tiles = -(-S // t_max)
    tile_s = _round_up(-(-S // num_tiles), 16)
    return tile_s, tile_s * num_tiles


# ------------------------------ CNN block -------------------------------------

def cnn_block(x_nhwc, p, *, use_activation_fn=True, residual=None,
              relu_after_residual=False, padding=1):
    """Conv2d(3x3, pad=1) + BatchNorm2d(train mode) [+ residual] [+ ReLU].

    x_nhwc: (N, H, W, Cin) activations (any float; cast to bf16 internally).
    Returns (N, H, W, Cout) bf16.
    NOTE: the conv bias p["b"] is not applied — it is subtracted exactly by the
    train-mode BatchNorm mean, so dropping it is mathematically exact.
    """
    weight, gamma, beta = p["w"], p["gamma"], p["beta"]
    N, H, W, Cin = x_nhwc.shape
    Cout, _, KH, KW = weight.shape
    Hout = H + 2 * padding - KH + 1
    Wout = W + 2 * padding - KW + 1
    M = N * Hout * Wout
    K = KH * KW * Cin
    K_pad = _round_up(K, 16)                       # minimal pad (no 128-blowup)
    if Cout <= _LANES and _LANES % Cout == 0:
        F = _LANES // Cout                         # spatial rows folded per slab
    else:
        F = 1
    L = F * Cout                                   # lane width of folded slabs

    # ---- glue: im2col patches in bf16 ----
    # TODO(synk): replace with in-kernel halo-DMA patch gather to delete the
    # KH*KW im2col materialization entirely.
    xb = x_nhwc.astype(jnp.bfloat16)
    xp = jnp.pad(xb, ((0, 0), (padding, padding), (padding, padding), (0, 0)))
    cols = [xp[:, kh:kh + Hout, kw:kw + Wout, :]
            for kh in range(KH) for kw in range(KW)]
    xcol = jnp.concatenate(cols, axis=-1).reshape(M, K)

    # ---- fold F spatial rows per 128-lane slab; tile + pad the slab rows ----
    S = -(-M // F)
    tile_s, S_pad = _pick_tiling(S, lhs_row_bytes=F * K_pad * 2)
    M_pad = S_pad * F
    num_tiles = S_pad // tile_s
    xcol = jnp.pad(xcol, ((0, M_pad - M), (0, K_pad - K)))
    xcol_f = xcol.reshape(S_pad, F * K_pad)        # free contiguous reshape

    # Block-diagonal weight so y_f[s, f*Cout + c] == conv(row s*F + f, channel c).
    wcol = jnp.transpose(weight, (2, 3, 1, 0)).reshape(K, Cout).astype(jnp.float32)
    wcol = jnp.pad(wcol, ((0, K_pad - K), (0, 0)))
    w_bd = jnp.kron(jnp.eye(F, dtype=jnp.float32), wcol).astype(jnp.bfloat16)

    mosaic = _mosaic_params()

    # ---- pass 1: tiled matmul + per-tile BN partial sums (f32 stats, bf16 y) ----
    y_flat, stats = pl.pallas_call(
        _conv_pass1_kernel,
        out_shape=(jax.ShapeDtypeStruct((S_pad, L), jnp.bfloat16),
                   jax.ShapeDtypeStruct((num_tiles, 8, L), jnp.float32)),
        grid=(num_tiles,),
        in_specs=[pl.BlockSpec((tile_s, F * K_pad), lambda i: (i, 0)),
                  pl.BlockSpec((F * K_pad, L), lambda i: (0, 0))],
        out_specs=(pl.BlockSpec((tile_s, L), lambda i: (i, 0)),
                   pl.BlockSpec((1, 8, L), lambda i: (i, 0, 0))),
        compiler_params=mosaic,
        cost_estimate=pl.CostEstimate(
            flops=2 * S_pad * (F * K_pad) * L,
            transcendentals=0,
            bytes_accessed=(2 * S_pad * F * K_pad + 2 * F * K_pad * L
                            + 2 * S_pad * L + 4 * num_tiles * 8 * L)),
    )(xcol_f, w_bd)

    # ---- finalize BN stats over the TRUE M extent (tiny XLA reduction) ----
    # Padded rows are all-zero -> contribute 0 to sum/sumsq, so dividing by the
    # true M keeps the statistics exact.
    sums = jnp.sum(stats[:, 0, :], axis=0).reshape(F, Cout).sum(axis=0)
    sqs = jnp.sum(stats[:, 1, :], axis=0).reshape(F, Cout).sum(axis=0)
    mean = sums / M
    var = jnp.maximum(sqs / M - mean * mean, 0.0)      # biased batch variance
    # TODO(synk): switch to per-tile (count, sum, M2) Welford combine if M grows
    # large enough for E[y^2]-E[y]^2 cancellation to matter.
    inv_std = lax.rsqrt(var + _BN_EPS)
    g32 = gamma.astype(jnp.float32)
    b32 = beta.astype(jnp.float32)
    scale = jnp.tile(g32 * inv_std, F).reshape(1, L)
    shift = jnp.tile(b32 - mean * g32 * inv_std, F).reshape(1, L)

    # ---- pass 2: normalize (+ residual) (+ ReLU), lane-dense bf16 out ----
    apply_relu = use_activation_fn or relu_after_residual
    args = [y_flat, scale, shift]
    in_specs = [pl.BlockSpec((tile_s, L), lambda i: (i, 0)),
                pl.BlockSpec((1, L), lambda i: (0, 0)),
                pl.BlockSpec((1, L), lambda i: (0, 0))]
    res_bytes = 0
    if residual is not None:
        res_flat = residual.astype(jnp.bfloat16).reshape(M, Cout)
        if M_pad != M:
            res_flat = jnp.pad(res_flat, ((0, M_pad - M), (0, 0)))
        res_fold = res_flat.reshape(S_pad, L)      # free contiguous reshape
        args.append(res_fold)
        in_specs.append(pl.BlockSpec((tile_s, L), lambda i: (i, 0)))
        kern = functools.partial(_bn_act_res_kernel, apply_relu=apply_relu)
        res_bytes = 2 * S_pad * L
    else:
        kern = functools.partial(_bn_act_kernel, apply_relu=apply_relu)

    out_fold = pl.pallas_call(
        kern,
        out_shape=jax.ShapeDtypeStruct((S_pad, L), jnp.bfloat16),
        grid=(num_tiles,),
        in_specs=in_specs,
        out_specs=pl.BlockSpec((tile_s, L), lambda i: (i, 0)),
        compiler_params=mosaic,
        cost_estimate=pl.CostEstimate(
            flops=3 * S_pad * L,
            transcendentals=0,
            bytes_accessed=2 * S_pad * L + 2 * S_pad * L + 8 * L + res_bytes),
    )(*args)

    out_flat = out_fold.reshape(M_pad, Cout)[:M]   # free unfold + row trim
    return out_flat.reshape(N, Hout, Wout, Cout)


# --------------------- WPODNet graph (NHWC glue around the kernels) -----------

def max_pool_2x2(x_nhwc):
    n, h, w, c = x_nhwc.shape
    return x_nhwc.reshape(n, h // 2, 2, w // 2, 2, c).max(axis=(2, 4))


def _init_conv_block(key, cin, cout, k):
    kw_key, kb_key = jax.random.split(key)
    bound = 1.0 / np.sqrt(cin * k * k)
    return {
        "w": jax.random.uniform(kw_key, (cout, cin, k, k), jnp.float32, -bound, bound),
        # bias kept for parameter fidelity; it cancels exactly under train-mode BN.
        "b": jax.random.uniform(kb_key, (cout,), jnp.float32, -bound, bound),
        "gamma": jnp.ones((cout,), jnp.float32),
        "beta": jnp.zeros((cout,), jnp.float32),
    }


def init_wpodnet_params(key, in_channels=3):
    params = []
    cin = in_channels
    for layer in ARCHITECTURE:
        name = layer[0]
        if name == "conv":
            _, cout, k = layer
            key, sub = jax.random.split(key)
            params.append(_init_conv_block(sub, cin, cout, k))
            cin = cout
        elif name == "max_pooling":
            params.append(None)
        elif name == "res":
            _, cout, k = layer
            key, s1, s2 = jax.random.split(key, 3)
            params.append((_init_conv_block(s1, cin, cout, k),
                           _init_conv_block(s2, cout, cout, k)))
            cin = cout
        elif name == "detection":
            _, k = layer
            key, s1, s2 = jax.random.split(key, 3)
            params.append((_init_conv_block(s1, cin, 2, k),
                           _init_conv_block(s2, cin, 6, k)))
    return params


def wpodnet_forward(x_nchw, params):
    """WPODNet forward: NCHW f32 in -> NCHW f32 out ((N, 8, H/16, W/16))."""
    x = jnp.transpose(x_nchw, (0, 2, 3, 1)).astype(jnp.bfloat16)   # NHWC once
    for layer, p in zip(ARCHITECTURE, params):
        name = layer[0]
        if name == "conv":
            x = cnn_block(x, p, use_activation_fn=True)
        elif name == "max_pooling":
            # TODO(synk): fuse the 2x2 pool into the preceding pass-2 kernel once
            # the grid is spatially tiled (saves one activation round-trip).
            x = max_pool_2x2(x)
        elif name == "res":
            p1, p2 = p
            y = cnn_block(x, p1, use_activation_fn=True)
            x = cnn_block(y, p2, use_activation_fn=False,
                          residual=x, relu_after_residual=True)
        elif name == "detection":
            p1, p2 = p
            # Fuse both heads into one Cout=8 conv+BN (BN is per-channel, so the
            # channel concatenation is numerically identical); halves the im2col,
            # the x re-read, and the launch overhead of the final stage.
            pf = {"w": jnp.concatenate([p1["w"], p2["w"]], axis=0),
                  "b": jnp.concatenate([p1["b"], p2["b"]], axis=0),
                  "gamma": jnp.concatenate([p1["gamma"], p2["gamma"]], axis=0),
                  "beta": jnp.concatenate([p1["beta"], p2["beta"]], axis=0)}
            o = cnn_block(x, pf, use_activation_fn=False).astype(jnp.float32)
            o1 = jax.nn.softmax(o[..., :2], axis=-1)   # NHWC channel == torch dim=1
            x = jnp.concatenate([o1, o[..., 2:]], axis=-1)
    return jnp.transpose(x, (0, 3, 1, 2)).astype(jnp.float32)      # back to NCHW


# --------------------------- pure-JAX reference --------------------------------

def _cnn_block_ref(x_nhwc, p, use_activation_fn=True):
    """Reference CNNBlock with matching numerics (bf16 conv operands, f32 BN)."""
    lhs = x_nhwc.astype(jnp.bfloat16)
    rhs = jnp.transpose(p["w"], (2, 3, 1, 0)).astype(jnp.bfloat16)   # HWIO
    y = lax.conv_general_dilated(
        lhs, rhs, window_strides=(1, 1), padding=((1, 1), (1, 1)),
        dimension_numbers=("NHWC", "HWIO", "NHWC"),
        preferred_element_type=jnp.float32)
    # (conv bias omitted — cancels exactly under train-mode BatchNorm)
    mean = jnp.mean(y, axis=(0, 1, 2))
    var = jnp.mean((y - mean) ** 2, axis=(0, 1, 2))
    t = (y - mean) * lax.rsqrt(var + _BN_EPS) * p["gamma"] + p["beta"]
    if use_activation_fn:
        t = jnp.maximum(t, 0.0)
    return t.astype(jnp.bfloat16)


# ----------------------------------- main ---------------------------------------

if __name__ == "__main__":
    root = jax.random.PRNGKey(0)
    k_blk_x, k_blk_p, k_net_x, k_net_p = jax.random.split(root, 4)

    # 1) Standalone CNNBlock correctness check vs pure-JAX reference.
    N, H, W, Cin, Cout = 2, 16, 16, 4, 8
    x_blk = jax.random.normal(k_blk_x, (N, H, W, Cin), jnp.float32)   # NHWC
    p_blk = _init_conv_block(k_blk_p, Cin, Cout, 3)
    out_blk = jax.block_until_ready(cnn_block(x_blk, p_blk, use_activation_fn=True))
    ref_blk = jax.block_until_ready(_cnn_block_ref(x_blk, p_blk, use_activation_fn=True))
    assert out_blk.shape == (N, H, W, Cout)
    np.testing.assert_allclose(np.asarray(out_blk, np.float32),
                               np.asarray(ref_blk, np.float32),
                               rtol=3e-2, atol=3e-2)

    # 2) Full WPODNet forward at a small size (spatial must be divisible by 16).
    x = jax.random.normal(k_net_x, (2, 3, 32, 32), jnp.float32)       # NCHW like torch
    params = init_wpodnet_params(k_net_p, in_channels=3)
    fwd = jax.jit(wpodnet_forward)
    out = jax.block_until_ready(fwd(x, params))
    assert out.shape == (2, 8, 2, 2), out.shape
    assert np.isfinite(np.asarray(out)).all()

    print("KERNEL_OK")
</pallas_src>

<mosaic_0001>
module attributes {stable_mosaic.version = 11 : i64} {
  func.func @_conv_pass1_kernel(%arg0: i32, %arg1: memref<32x768xbf16, #tpu.memory_space<vmem>>, %arg2: memref<768x128xbf16, #tpu.memory_space<vmem>>, %arg3: memref<32x128xbf16, #tpu.memory_space<vmem>>, %arg4: memref<1x8x128xf32, #tpu.memory_space<vmem>>) attributes {dimension_semantics = [#tpu.dimension_semantics<parallel>], iteration_bounds = array<i64: 1>, scalar_prefetch = 0 : i64, scratch_operands = 0 : i64, tpu.core_type = #tpu.core_type<tc>, window_params = [{transform_indices = @transform_0, window_bounds = array<i64: 32, 768>}, {pipeline_mode = #tpu.pipeline_mode<synchronous>, transform_indices = @transform_1, window_bounds = array<i64: 768, 128>}, {transform_indices = @transform_2, window_bounds = array<i64: 32, 128>}, {transform_indices = @transform_3, window_bounds = array<i64: 1, 8, 128>}]} {
    %c0 = arith.constant 0 : index
    %c0_0 = arith.constant 0 : index
    %0 = vector.load %arg1[%c0, %c0_0] : memref<32x768xbf16, #tpu.memory_space<vmem>>, vector<32x768xbf16>
    %c0_1 = arith.constant 0 : index
    %c0_2 = arith.constant 0 : index
    %1 = vector.load %arg2[%c0_1, %c0_2] : memref<768x128xbf16, #tpu.memory_space<vmem>>, vector<768x128xbf16>
    %cst = arith.constant dense<0.000000e+00> : vector<32x128xf32>
    %2 = tpu.matmul %0, %1, %cst {dimension_numbers = #tpu.dot_dimension_numbers<[1], [0], [0], [1], [0, 0, 1, 1], [], []>} : vector<32x768xbf16>, vector<768x128xbf16>, vector<32x128xf32> -> vector<32x128xf32>
    %3 = arith.truncf %2 : vector<32x128xf32> to vector<32x128xbf16>
    %c0_3 = arith.constant 0 : index
    %c0_4 = arith.constant 0 : index
    %4 = vector.load %arg3[%c0_3, %c0_4] : memref<32x128xbf16, #tpu.memory_space<vmem>>, vector<32x128xbf16>
    tpu.vector_store %arg3[%c0_3, %c0_4], %3 {strides = array<i32>} : memref<32x128xbf16, #tpu.memory_space<vmem>>, vector<32x128xbf16>,
    %cst_5 = arith.constant dense<0.000000e+00> : vector<128xf32>
    %5 = vector.multi_reduction <add>, %2, %cst_5 [0] : vector<32x128xf32> to vector<128xf32>
    %6 = vector.shape_cast %5 : vector<128xf32> to vector<1x128xf32>
    %7 = arith.mulf %2, %2 : vector<32x128xf32>
    %cst_6 = arith.constant dense<0.000000e+00> : vector<128xf32>
    %8 = vector.multi_reduction <add>, %7, %cst_6 [0] : vector<32x128xf32> to vector<128xf32>
    %9 = vector.shape_cast %8 : vector<128xf32> to vector<1x128xf32>
    %10 = tpu.iota {dimensions = array<i32: 0>} : vector<8x128xi32>
    %c0_i32 = arith.constant 0 : i32
    %11 = vector.broadcast %c0_i32 : i32 to vector<8x128xi32>
    %12 = arith.cmpi eq, %10, %11 : vector<8x128xi32>
    %cst_7 = arith.constant 0.000000e+00 : f32
    %13 = vector.shape_cast %6 : vector<1x128xf32> to vector<1x128xf32>
    %14 = vector.broadcast %13 : vector<1x128xf32> to vector<8x128xf32>
    %15 = vector.broadcast %cst_7 : f32 to vector<8x128xf32>
    %16 = arith.select %12, %14, %15 : vector<8x128xi1>, vector<8x128xf32>
    %c1_i32 = arith.constant 1 : i32
    %17 = vector.broadcast %c1_i32 : i32 to vector<8x128xi32>
    %18 = arith.cmpi eq, %10, %17 : vector<8x128xi32>
    %cst_8 = arith.constant 0.000000e+00 : f32
    %19 = vector.shape_cast %9 : vector<1x128xf32> to vector<1x128xf32>
    %20 = vector.broadcast %19 : vector<1x128xf32> to vector<8x128xf32>
    %21 = vector.broadcast %cst_8 : f32 to vector<8x128xf32>
    %22 = arith.select %18, %20, %21 : vector<8x128xi1>, vector<8x128xf32>
    %23 = arith.addf %16, %22 : vector<8x128xf32>
    %c0_9 = arith.constant 0 : index
    %c0_10 = arith.constant 0 : index
    %c0_11 = arith.constant 0 : index
    %24 = vector.load %arg4[%c0_9, %c0_10, %c0_11] : memref<1x8x128xf32, #tpu.memory_space<vmem>>, vector<1x8x128xf32>
    %25 = vector.shape_cast %24 : vector<1x8x128xf32> to vector<8x128xf32>
    %26 = vector.shape_cast %23 : vector<8x128xf32> to vector<1x8x128xf32>
    tpu.vector_store %arg4[%c0_9, %c0_10, %c0_11], %26 {strides = array<i32>} : memref<1x8x128xf32, #tpu.memory_space<vmem>>, vector<1x8x128xf32>,
    return
  }
  func.func @transform_0(%arg0: i32) -> (i32, i32) {
    %c0_i32 = arith.constant 0 : i32
    %c0_i32_0 = arith.constant 0 : i32
    return %arg0, %c0_i32 : i32, i32
  }
  func.func @transform_1(%arg0: i32) -> (i32, i32) {
    %c0_i32 = arith.constant 0 : i32
    %c0_i32_0 = arith.constant 0 : i32
    %c0_i32_1 = arith.constant 0 : i32
    return %c0_i32, %c0_i32_0 : i32, i32
  }
  func.func @transform_2(%arg0: i32) -> (i32, i32) {
    %c0_i32 = arith.constant 0 : i32
    %c0_i32_0 = arith.constant 0 : i32
    return %arg0, %c0_i32 : i32, i32
  }
  func.func @transform_3(%arg0: i32) -> (i32, i32, i32) {
    %c0_i32 = arith.constant 0 : i32
    %c0_i32_0 = arith.constant 0 : i32
    %c0_i32_1 = arith.constant 0 : i32
    return %arg0, %c0_i32, %c0_i32_0 : i32, i32, i32
  }
}

</mosaic_0001>

<llo_original>
// kernel: tpu_custom_call.1
$region0: #{tpu_custom_call.1}
  #allocation0 [shape = 'u32[]', space=smem, size = 0x4, offset = 0x4, fixed_abs, tag = 'smem constant byte address 0x4 - core index']
  #allocation1 [shape = 'u32[144,128]{1,0:T(1,128)}', space=vmem, size = 0x12000, scoped, tag = 'internal scratch']
  %s0 = inlined_call_operand.hbm [shape: bf16[32,768], index: 0, kind: input, shape index: {}]
  %s1 = inlined_call_operand.hbm [shape: bf16[768,128], index: 1, kind: input, shape index: {}]
  %s2 = inlined_call_operand.hbm [shape: bf16[32,128], index: 2, kind: output, shape index: {0}]
  %s3 = inlined_call_operand.hbm [shape: f32[1,8,128], index: 3, kind: output, shape index: {1}]
  %4 = xla_tuple %s2, %s3
  %s5 = sld [smem:[#allocation0]]
  $region34: #{tpu_custom_call.1} parent=0
    _
  %s7 = ssub.s32 1, %s5
  %s8 = scalar_select 0, %s7, %s5
  $region1: #{tpu_custom_call.1} parent=0
    #allocation2 [shape = 'u8[49152]{0}', space=vmem, size = 0xc000, scoped, tag = 'input window, operand 0, single buffered']
    #allocation3 [shape = 's32[1]{0}', space=sflag, size = 0x4, scoped, tag = 'scoped memory for tpu_custom_call.1']
    #allocation4 [shape = 's32[1]{0}', space=sflag, size = 0x4, scoped, tag = 'scoped memory for tpu_custom_call.1']
    #allocation5 [shape = 'u8[196608]{0}', space=vmem, size = 0x30000, scoped, tag = 'input window, operand 1, single buffered']
    #allocation6 [shape = 's32[1]{0}', space=sflag, size = 0x4, scoped, tag = 'scoped memory for tpu_custom_call.1']
    #allocation7 [shape = 'u8[8192]{0}', space=vmem, size = 0x2000, scoped, tag = 'output window, operand 0, single buffered']
    #allocation8 [shape = 'u8[4096]{0}', space=vmem, size = 0x1000, scoped, tag = 'output window, operand 1, single buffered']
    #allocation9 [shape = 's32[1]{0}', space=sflag, size = 0x4, scoped, tag = 'scoped memory for tpu_custom_call.1']
    %9 = vsyncpa [#allocation3], 0
    %10 = vsyncpa [#allocation6], 0
    %11 = vsyncpa [#allocation4], 0
    %12 = vsyncpa [#allocation9], 0
    // Predicated region
    $region2: #{tpu_custom_call.1} parent=1 // pred_check
      _
    $region3: #{tpu_custom_call.1} parent=1 // pred_check_branch
      %14 = sbr.rel (0) target = $region5
    $region4: #{tpu_custom_call.1} parent=1 // pred_region
      %s16 = ssub.s32 1536, 1536
      %17 = vsyncadd [#allocation3], %s16
      %s18 = sshll.u32 [#allocation2], 4
      %s19 = int_to_ptr.vmem [resolvable:$true] %s18
      %24 = dma.hbm_to_vmem [thread:$0]  %s0, 1536, %s19, [#allocation3], 384, 384, 24
    $region5: #{tpu_custom_call.1} parent=1 // pred_fallthru
      _
    // Predicated region
    $region6: #{tpu_custom_call.1} parent=1 // pred_check
      _
    $region7: #{tpu_custom_call.1} parent=1 // pred_check_branch
      %26 = sbr.rel (0) target = $region9
    $region8: #{tpu_custom_call.1} parent=1 // pred_region
      %s28 = ssub.s32 6144, 6144
      %29 = vsyncadd [#allocation6], %s28
      %s30 = sshll.u32 [#allocation5], 4
      %s31 = int_to_ptr.vmem [resolvable:$true] %s30
      %36 = dma.hbm_to_vmem [thread:$0]  %s1, 6144, %s31, [#allocation6], 64, 64, 4
    $region9: #{tpu_custom_call.1} parent=1 // pred_fallthru
      _
    // Predicated region
    $region10: #{tpu_custom_call.1} parent=1 // pred_check
      _
    $region11: #{tpu_custom_call.1} parent=1 // pred_check_branch
      %38 = sbr.rel (0) target = $region13
    $region12: #{tpu_custom_call.1} parent=1 // pred_region
      %39 = dma.done [#allocation3], 1536
    $region13: #{tpu_custom_call.1} parent=1 // pred_fallthru
      _
    // Predicated region
    $region14: #{tpu_custom_call.1} parent=1 // pred_check
      _
    $region15: #{tpu_custom_call.1} parent=1 // pred_check_branch
      %41 = sbr.rel (0) target = $region17
    $region16: #{tpu_custom_call.1} parent=1 // pred_region
      %42 = dma.done [#allocation6], 6144
    $region17: #{tpu_custom_call.1} parent=1 // pred_fallthru
      _
    %v44 = vld [vmem:[#allocation2] sm:$0xff]
    %v45 = vld [vmem:[#allocation2 + $0x8] sm:$0xff]
    %v46 = vld [vmem:[#allocation2 + $0x10] sm:$0xff]
    %v47 = vld [vmem:[#allocation2 + $0x18] sm:$0xff]
    %v48 = vld [vmem:[#allocation2 + $0x20] sm:$0xff]
    %v49 = vld [vmem:[#allocation2 + $0x28] sm:$0xff]
    %v50 = vld [vmem:[#allocation2 + $0x30] sm:$0xff]
    %v51 = vld [vmem:[#allocation2 + $0x38] sm:$0xff]
    %v52 = vld [vmem:[#allocation2 + $0x40] sm:$0xff]
    %v53 = vld [vmem:[#allocation2 + $0x48] sm:$0xff]
    %v54 = vld [vmem:[#allocation2 + $0x50] sm:$0xff]
    %v55 = vld [vmem:[#allocation2 + $0x58] sm:$0xff]
    %v56 = vld [vmem:[#allocation5] sm:$0xf]
    %v57 = vld [vmem:[#allocation5 + $0x4] sm:$0xf]
    %v58 = vld [vmem:[#allocation5 + $0x8] sm:$0xf]
    %v59 = vld [vmem:[#allocation5 + $0xc] sm:$0xf]
    %v60 = vld [vmem:[#allocation5 + $0x10] sm:$0xf]
    %v61 = vld [vmem:[#allocation5 + $0x14] sm:$0xf]
    %v62 = vld [vmem:[#allocation5 + $0x18] sm:$0xf]
    %v63 = vld [vmem:[#allocation5 + $0x1c] sm:$0xf]
    %v64 = vld [vmem:[#allocation5 + $0x20] sm:$0xf]
    %v65 = vld [vmem:[#allocation5 + $0x24] sm:$0xf]
    %v66 = vld [vmem:[#allocation5 + $0x28] sm:$0xf]
    %v67 = vld [vmem:[#allocation5 + $0x2c] sm:$0xf]
    %v68 = vld [vmem:[#allocation5 + $0x30] sm:$0xf]
    %v69 = vld [vmem:[#allocation5 + $0x34] sm:$0xf]
    %v70 = vld [vmem:[#allocation5 + $0x38] sm:$0xf]
    %v71 = vld [vmem:[#allocation5 + $0x3c] sm:$0xf]
    %v72 = vld [vmem:[#allocation5 + $0x40] sm:$0xf]
    %v73 = vld [vmem:[#allocation5 + $0x44] sm:$0xf]
    %v74 = vld [vmem:[#allocation5 + $0x48] sm:$0xf]
    %v75 = vld [vmem:[#allocation5 + $0x4c] sm:$0xf]
    %v76 = vld [vmem:[#allocation5 + $0x50] sm:$0xf]
    %v77 = vld [vmem:[#allocation5 + $0x54] sm:$0xf]
    %v78 = vld [vmem:[#allocation5 + $0x58] sm:$0xf]
    %v79 = vld [vmem:[#allocation5 + $0x5c] sm:$0xf]
    %v80 = vld [vmem:[#allocation5 + $0x60] sm:$0xf]
    %v81 = vld [vmem:[#allocation5 + $0x64] sm:$0xf]
    %v82 = vld [vmem:[#allocation5 + $0x68] sm:$0xf]
    %v83 = vld [vmem:[#allocation5 + $0x6c] sm:$0xf]
    %v84 = vld [vmem:[#allocation5 + $0x70] sm:$0xf]
    %v85 = vld [vmem:[#allocation5 + $0x74] sm:$0xf]
    %v86 = vld [vmem:[#allocation5 + $0x78] sm:$0xf]
    %v87 = vld [vmem:[#allocation5 + $0x7c] sm:$0xf]
    %v88 = vld [vmem:[#allocation5 + $0x80] sm:$0xf]
    %v89 = vld [vmem:[#allocation5 + $0x84] sm:$0xf]
    %v90 = vld [vmem:[#allocation5 + $0x88] sm:$0xf]
    %v91 = vld [vmem:[#allocation5 + $0x8c] sm:$0xf]
    %v92 = vld [vmem:[#allocation5 + $0x90] sm:$0xf]
    %v93 = vld [vmem:[#allocation5 + $0x94] sm:$0xf]
    %v94 = vld [vmem:[#allocation5 + $0x98] sm:$0xf]
    %v95 = vld [vmem:[#allocation5 + $0x9c] sm:$0xf]
    %v96 = vld [vmem:[#allocation5 + $0xa0] sm:$0xf]
    %v97 = vld [vmem:[#allocation5 + $0xa4] sm:$0xf]
    %v98 = vld [vmem:[#allocation5 + $0xa8] sm:$0xf]
    %v99 = vld [vmem:[#allocation5 + $0xac] sm:$0xf]
    %v100 = vld [vmem:[#allocation5 + $0xb0] sm:$0xf]
    %v101 = vld [vmem:[#allocation5 + $0xb4] sm:$0xf]
    %v102 = vld [vmem:[#allocation5 + $0xb8] sm:$0xf]
    %v103 = vld [vmem:[#allocation5 + $0xbc] sm:$0xf]
    %v104 = vld [vmem:[#allocation5 + $0xc0] sm:$0xf]
    %v105 = vld [vmem:[#allocation5 + $0xc4] sm:$0xf]
    %v106 = vld [vmem:[#allocation5 + $0xc8] sm:$0xf]
    %v107 = vld [vmem:[#allocation5 + $0xcc] sm:$0xf]
    %v108 = vld [vmem:[#allocation5 + $0xd0] sm:$0xf]
    %v109 = vld [vmem:[#allocation5 + $0xd4] sm:$0xf]
    %v110 = vld [vmem:[#allocation5 + $0xd8] sm:$0xf]
    %v111 = vld [vmem:[#allocation5 + $0xdc] sm:$0xf]
    %v112 = vld [vmem:[#allocation5 + $0xe0] sm:$0xf]
    %v113 = vld [vmem:[#allocation5 + $0xe4] sm:$0xf]
    %v114 = vld [vmem:[#allocation5 + $0xe8] sm:$0xf]
    %v115 = vld [vmem:[#allocation5 + $0xec] sm:$0xf]
    %v116 = vld [vmem:[#allocation5 + $0xf0] sm:$0xf]
    %v117 = vld [vmem:[#allocation5 + $0xf4] sm:$0xf]
    %v118 = vld [vmem:[#allocation5 + $0xf8] sm:$0xf]
    %v119 = vld [vmem:[#allocation5 + $0xfc] sm:$0xf]
    %v120 = vld [vmem:[#allocation5 + $0x100] sm:$0xf]
    %v121 = vld [vmem:[#allocation5 + $0x104] sm:$0xf]
    %v122 = vld [vmem:[#allocation5 + $0x108] sm:$0xf]
    %v123 = vld [vmem:[#allocation5 + $0x10c] sm:$0xf]
    %v124 = vld [vmem:[#allocation5 + $0x110] sm:$0xf]
    %v125 = vld [vmem:[#allocation5 + $0x114] sm:$0xf]
    %v126 = vld [vmem:[#allocation5 + $0x118] sm:$0xf]
    %v127 = vld [vmem:[#allocation5 + $0x11c] sm:$0xf]
    %v128 = vld [vmem:[#allocation5 + $0x120] sm:$0xf]
    %v129 = vld [vmem:[#allocation5 + $0x124] sm:$0xf]
    %v130 = vld [vmem:[#allocation5 + $0x128] sm:$0xf]
    %v131 = vld [vmem:[#allocation5 + $0x12c] sm:$0xf]
    %v132 = vld [vmem:[#allocation5 + $0x130] sm:$0xf]
    %v133 = vld [vmem:[#allocation5 + $0x134] sm:$0xf]
    %v134 = vld [vmem:[#allocation5 + $0x138] sm:$0xf]
    %v135 = vld [vmem:[#allocation5 + $0x13c] sm:$0xf]
    %v136 = vld [vmem:[#allocation5 + $0x140] sm:$0xf]
    %v137 = vld [vmem:[#allocation5 + $0x144] sm:$0xf]
    %v138 = vld [vmem:[#allocation5 + $0x148] sm:$0xf]
    %v139 = vld [vmem:[#allocation5 + $0x14c] sm:$0xf]
    %v140 = vld [vmem:[#allocation5 + $0x150] sm:$0xf]
    %v141 = vld [vmem:[#allocation5 + $0x154] sm:$0xf]
    %v142 = vld [vmem:[#allocation5 + $0x158] sm:$0xf]
    %v143 = vld [vmem:[#allocation5 + $0x15c] sm:$0xf]
    %v144 = vld [vmem:[#allocation5 + $0x160] sm:$0xf]
    %v145 = vld [vmem:[#allocation5 + $0x164] sm:$0xf]
    %v146 = vld [vmem:[#allocation5 + $0x168] sm:$0xf]
    %v147 = vld [vmem:[#allocation5 + $0x16c] sm:$0xf]
    %v148 = vld [vmem:[#allocation5 + $0x170] sm:$0xf]
    %v149 = vld [vmem:[#allocation5 + $0x174] sm:$0xf]
    %v150 = vld [vmem:[#allocation5 + $0x178] sm:$0xf]
    %v151 = vld [vmem:[#allocation5 + $0x17c] sm:$0xf]
    %v164 = vunpack.c.l.b16 %v44
    %v165 = vunpack.c.h.b16 %v44
    %v166 = vunpack.c.l.b16 %v45
    %v167 = vunpack.c.h.b16 %v45
    %v168 = vunpack.c.l.b16 %v46
    %v169 = vunpack.c.h.b16 %v46
    %v170 = vunpack.c.l.b16 %v47
    %v171 = vunpack.c.h.b16 %v47
    %v172 = vunpack.c.l.b16 %v48
    %v173 = vunpack.c.h.b16 %v48
    %v174 = vunpack.c.l.b16 %v49
    %v175 = vunpack.c.h.b16 %v49
    %v176 = vunpack.c.l.b16 %v50
    %v177 = vunpack.c.h.b16 %v50
    %v178 = vunpack.c.l.b16 %v51
    %v179 = vunpack.c.h.b16 %v51
    %v180 = vunpack.c.l.b16 %v52
    %v181 = vunpack.c.h.b16 %v52
    %v182 = vunpack.c.l.b16 %v53
    %v183 = vunpack.c.h.b16 %v53
    %v184 = vunpack.c.l.b16 %v54
    %v185 = vunpack.c.h.b16 %v54
    %v186 = vunpack.c.l.b16 %v55
    %v187 = vunpack.c.h.b16 %v55
    %v188 = vpack.c.b16 %v170, %v164
    %v189 = vpack.c.b16 %v171, %v165
    %v190 = vpack.c.b16 %v172, %v166
    %v191 = vpack.c.b16 %v173, %v167
    %v192 = vpack.c.b16 %v174, %v168
    %v193 = vpack.c.b16 %v175, %v169
    %v194 = vpack.c.b16 %v182, %v176
    %v195 = vpack.c.b16 %v183, %v177
    %v196 = vpack.c.b16 %v184, %v178
    %v197 = vpack.c.b16 %v185, %v179
    %v198 = vpack.c.b16 %v186, %v180
    %v199 = vpack.c.b16 %v187, %v181
    %v308 = vunpack.c.l.b16 %v56
    %v309 = vunpack.c.l.b16 %v57
    %v310 = vunpack.c.l.b16 %v58
    %v311 = vunpack.c.l.b16 %v59
    %v312 = vunpack.c.l.b16 %v60
    %v313 = vunpack.c.l.b16 %v61
    %v314 = vunpack.c.l.b16 %v62
    %v315 = vunpack.c.l.b16 %v63
    %v316 = vunpack.c.l.b16 %v64
    %v317 = vunpack.c.l.b16 %v65
    %v318 = vunpack.c.l.b16 %v66
    %v319 = vunpack.c.l.b16 %v67
    %v320 = vunpack.c.l.b16 %v68
    %v321 = vunpack.c.l.b16 %v69
    %v322 = vunpack.c.l.b16 %v70
    %v323 = vunpack.c.l.b16 %v71
    %v324 = vunpack.c.l.b16 %v72
    %v325 = vunpack.c.l.b16 %v73
    %v326 = vunpack.c.l.b16 %v74
    %v327 = vunpack.c.l.b16 %v75
    %v328 = vunpack.c.l.b16 %v76
    %v329 = vunpack.c.l.b16 %v77
    %v330 = vunpack.c.l.b16 %v78
    %v331 = vunpack.c.l.b16 %v79
    %v332 = vunpack.c.l.b16 %v80
    %v333 = vunpack.c.l.b16 %v81
    %v334 = vunpack.c.l.b16 %v82
    %v335 = vunpack.c.l.b16 %v83
    %v336 = vunpack.c.l.b16 %v84
    %v337 = vunpack.c.l.b16 %v85
    %v338 = vunpack.c.l.b16 %v86
    %v339 = vunpack.c.l.b16 %v87
    %v340 = vunpack.c.l.b16 %v88
    %v341 = vunpack.c.l.b16 %v89
    %v342 = vunpack.c.l.b16 %v90
    %v343 = vunpack.c.l.b16 %v91
    %v344 = vunpack.c.l.b16 %v92
    %v345 = vunpack.c.l.b16 %v93
    %v346 = vunpack.c.l.b16 %v94
    %v347 = vunpack.c.l.b16 %v95
    %v348 = vunpack.c.l.b16 %v96
    %v349 = vunpack.c.l.b16 %v97
    %v350 = vunpack.c.l.b16 %v98
    %v351 = vunpack.c.l.b16 %v99
    %v352 = vunpack.c.l.b16 %v100
    %v353 = vunpack.c.l.b16 %v101
    %v354 = vunpack.c.l.b16 %v102
    %v355 = vunpack.c.l.b16 %v103
    %v356 = vunpack.c.l.b16 %v104
    %v357 = vunpack.c.l.b16 %v105
    %v358 = vunpack.c.l.b16 %v106
    %v359 = vunpack.c.l.b16 %v107
    %v360 = vunpack.c.l.b16 %v108
    %v361 = vunpack.c.l.b16 %v109
    %v362 = vunpack.c.l.b16 %v110
    %v363 = vunpack.c.l.b16 %v111
    %v364 = vunpack.c.l.b16 %v112
    %v365 = vunpack.c.l.b16 %v113
    %v366 = vunpack.c.l.b16 %v114
    %v367 = vunpack.c.l.b16 %v115
    %v368 = vunpack.c.l.b16 %v116
    %v369 = vunpack.c.l.b16 %v117
    %v370 = vunpack.c.l.b16 %v118
    %v371 = vunpack.c.l.b16 %v119
    %v372 = vunpack.c.l.b16 %v120
    %v373 = vunpack.c.l.b16 %v121
    %v374 = vunpack.c.l.b16 %v122
    %v375 = vunpack.c.l.b16 %v123
    %v376 = vunpack.c.l.b16 %v124
    %v377 = vunpack.c.l.b16 %v125
    %v378 = vunpack.c.l.b16 %v126
    %v379 = vunpack.c.l.b16 %v127
    %v380 = vunpack.c.l.b16 %v128
    %v381 = vunpack.c.l.b16 %v129
    %v382 = vunpack.c.l.b16 %v130
    %v383 = vunpack.c.l.b16 %v131
    %v384 = vunpack.c.l.b16 %v132
    %v385 = vunpack.c.l.b16 %v133
    %v386 = vunpack.c.l.b16 %v134
    %v387 = vunpack.c.l.b16 %v135
    %v388 = vunpack.c.l.b16 %v136
    %v389 = vunpack.c.l.b16 %v137
    %v390 = vunpack.c.l.b16 %v138
    %v391 = vunpack.c.l.b16 %v139
    %v392 = vunpack.c.l.b16 %v140
    %v393 = vunpack.c.l.b16 %v141
    %v394 = vunpack.c.l.b16 %v142
    %v395 = vunpack.c.l.b16 %v143
    %v396 = vunpack.c.l.b16 %v144
    %v397 = vunpack.c.l.b16 %v145
    %v398 = vunpack.c.l.b16 %v146
    %v399 = vunpack.c.l.b16 %v147
    %v400 = vunpack.c.l.b16 %v148
    %v401 = vunpack.c.l.b16 %v149
    %v402 = vunpack.c.l.b16 %v150
    %v403 = vunpack.c.l.b16 %v151
    %v404 = vpack.c.b16 %v309, %v308
    %v405 = vpack.c.b16 %v311, %v310
    %v406 = vpack.c.b16 %v313, %v312
    %v407 = vpack.c.b16 %v315, %v314
    %v408 = vpack.c.b16 %v317, %v316
    %v409 = vpack.c.b16 %v319, %v318
    %v410 = vpack.c.b16 %v321, %v320
    %v411 = vpack.c.b16 %v323, %v322
    %v412 = vpack.c.b16 %v325, %v324
    %v413 = vpack.c.b16 %v327, %v326
    %v414 = vpack.c.b16 %v329, %v328
    %v415 = vpack.c.b16 %v331, %v330
    %v416 = vpack.c.b16 %v333, %v332
    %v417 = vpack.c.b16 %v335, %v334
    %v418 = vpack.c.b16 %v337, %v336
    %v419 = vpack.c.b16 %v339, %v338
    %v420 = vpack.c.b16 %v341, %v340
    %v421 = vpack.c.b16 %v343, %v342
    %v422 = vpack.c.b16 %v345, %v344
    %v423 = vpack.c.b16 %v347, %v346
    %v424 = vpack.c.b16 %v349, %v348
    %v425 = vpack.c.b16 %v351, %v350
    %v426 = vpack.c.b16 %v353, %v352
    %v427 = vpack.c.b16 %v355, %v354
    %v428 = vpack.c.b16 %v357, %v356
    %v429 = vpack.c.b16 %v359, %v358
    %v430 = vpack.c.b16 %v361, %v360
    %v431 = vpack.c.b16 %v363, %v362
    %v432 = vpack.c.b16 %v365, %v364
    %v433 = vpack.c.b16 %v367, %v366
    %v434 = vpack.c.b16 %v369, %v368
    %v435 = vpack.c.b16 %v371, %v370
    %v436 = vpack.c.b16 %v373, %v372
    %v437 = vpack.c.b16 %v375, %v374
    %v438 = vpack.c.b16 %v377, %v376
    %v439 = vpack.c.b16 %v379, %v378
    %v440 = vpack.c.b16 %v381, %v380
    %v441 = vpack.c.b16 %v383, %v382
    %v442 = vpack.c.b16 %v385, %v384
    %v443 = vpack.c.b16 %v387, %v386
    %v444 = vpack.c.b16 %v389, %v388
    %v445 = vpack.c.b16 %v391, %v390
    %v446 = vpack.c.b16 %v393, %v392
    %v447 = vpack.c.b16 %v395, %v394
    %v448 = vpack.c.b16 %v397, %v396
    %v449 = vpack.c.b16 %v399, %v398
    %v450 = vpack.c.b16 %v401, %v400
    %v451 = vpack.c.b16 %v403, %v402
    %500 = vmatprep.subr.bf16.mxu0 0
    %501 = vmatpush1.bf16.msra.mxu0 %v404
    %502 = vmatprep.subr.bf16.mxu0 0
    %503 = vmatpush1.bf16.msra.mxu0 %v405
    %504 = vmatprep.subr.bf16.mxu0 0
    %505 = vmatpush1.bf16.msra.mxu0 %v406
    %506 = vmatprep.subr.bf16.mxu0 0
    %507 = vmatpush1.bf16.msra.mxu0 %v407
    %508 = vmatprep.subr.bf16.mxu0 0
    %509 = vmatpush1.bf16.msra.mxu0 %v408
    %510 = vmatprep.subr.bf16.mxu0 0
    %511 = vmatpush1.bf16.msra.mxu0 %v409
    %512 = vmatprep.subr.bf16.mxu0 0
    %513 = vmatpush1.bf16.msra.mxu0 %v410
    %514 = vmatprep.subr.bf16.mxu0 0
    %515 = vmatpush1.bf16.msra.mxu0 %v411
    %516 = vmatprep.subr.bf16.mxu0 0
    %517 = vmatpush1.bf16.msra.mxu0 %v412
    %518 = vmatprep.subr.bf16.mxu0 0
    %519 = vmatpush1.bf16.msra.mxu0 %v413
    %520 = vmatprep.subr.bf16.mxu0 0
    %521 = vmatpush1.bf16.msra.mxu0 %v414
    %522 = vmatprep.subr.bf16.mxu0 0
    %523 = vmatpush1.bf16.msra.mxu0 %v415
    %524 = vmatprep.subr.bf16.mxu0 0
    %525 = vmatpush1.bf16.msra.mxu0 %v416
    %526 = vmatprep.subr.bf16.mxu0 0
    %527 = vmatpush1.bf16.msra.mxu0 %v417
    %528 = vmatprep.subr.bf16.mxu0 0
    %529 = vmatpush1.bf16.msra.mxu0 %v418
    %530 = vmatprep.subr.bf16.mxu0 0
    %531 = vmatpush1.bf16.msra.mxu0 %v419
    %532 = vmatprep.mubr.bf16.mxu0 %v189
    %533 = vmatmul.mubr.bf16.gmra.mrb[0].mxu0 %v188
    %v534 = vpop.f32.mrb[0].mxu0
    %v535 = vadd.f32 0.0, %v534
    %v536 = vpop.f32.mrb[0].mxu0
    %v537 = vpop.f32.mrb[0].mxu0
    %v538 = vadd.f32 0.0, %v537
    %v539 = vpop.f32.mrb[0].mxu0
    %540 = vmatprep.mubr.bf16.mxu0 %v195
    %541 = vmatmul.mubr.bf16.gmra.mrb[0].mxu0 %v194
    %v542 = vpop.f32.mrb[0].mxu0
    %v543 = vadd.f32 0.0, %v542
    %v544 = vpop.f32.mrb[0].mxu0
    %v545 = vpop.f32.mrb[0].mxu0
    %v546 = vadd.f32 0.0, %v545
    %v547 = vpop.f32.mrb[0].mxu0
    %548 = vdwg.mxu0
    %549 = vmatprep.subr.bf16.mxu0 0
    %550 = vmatpush1.bf16.msra.mxu0 %v420
    %551 = vmatprep.subr.bf16.mxu0 0
    %552 = vmatpush1.bf16.msra.mxu0 %v421
    %553 = vmatprep.subr.bf16.mxu0 0
    %554 = vmatpush1.bf16.msra.mxu0 %v422
    %555 = vmatprep.subr.bf16.mxu0 0
    %556 = vmatpush1.bf16.msra.mxu0 %v423
    %557 = vmatprep.subr.bf16.mxu0 0
    %558 = vmatpush1.bf16.msra.mxu0 %v424
    %559 = vmatprep.subr.bf16.mxu0 0
    %560 = vmatpush1.bf16.msra.mxu0 %v425
    %561 = vmatprep.subr.bf16.mxu0 0
    %562 = vmatpush1.bf16.msra.mxu0 %v426
    %563 = vmatprep.subr.bf16.mxu0 0
    %564 = vmatpush1.bf16.msra.mxu0 %v427
    %565 = vmatprep.subr.bf16.mxu0 0
    %566 = vmatpush1.bf16.msra.mxu0 %v428
    %567 = vmatprep.subr.bf16.mxu0 0
    %568 = vmatpush1.bf16.msra.mxu0 %v429
    %569 = vmatprep.subr.bf16.mxu0 0
    %570 = vmatpush1.bf16.msra.mxu0 %v430
    %571 = vmatprep.subr.bf16.mxu0 0
    %572 = vmatpush1.bf16.msra.mxu0 %v431
    %573 = vmatprep.subr.bf16.mxu0 0
    %574 = vmatpush1.bf16.msra.mxu0 %v432
    %575 = vmatprep.subr.bf16.mxu0 0
    %576 = vmatpush1.bf16.msra.mxu0 %v433
    %577 = vmatprep.subr.bf16.mxu0 0
    %578 = vmatpush1.bf16.msra.mxu0 %v434
    %579 = vmatprep.subr.bf16.mxu0 0
    %580 = vmatpush1.bf16.msra.mxu0 %v435
    %581 = vmatprep.mubr.bf16.mxu0 %v191
    %582 = vmatmul.mubr.bf16.gmra.mrb[0].mxu0 %v190
    %v583 = vpop.f32.mrb[0].mxu0
    %v584 = vadd.f32 %v535, %v583
    %v585 = vpop.f32.mrb[0].mxu0
    %v586 = vpop.f32.mrb[0].mxu0
    %v587 = vadd.f32 %v538, %v586
    %v588 = vpop.f32.mrb[0].mxu0
    %589 = vmatprep.mubr.bf16.mxu0 %v197
    %590 = vmatmul.mubr.bf16.gmra.mrb[0].mxu0 %v196
    %v591 = vpop.f32.mrb[0].mxu0
    %v592 = vadd.f32 %v543, %v591
    %v593 = vpop.f32.mrb[0].mxu0
    %v594 = vpop.f32.mrb[0].mxu0
    %v595 = vadd.f32 %v546, %v594
    %v596 = vpop.f32.mrb[0].mxu0
    %597 = vdwg.mxu0
    %598 = vmatprep.subr.bf16.mxu0 0
    %599 = vmatpush1.bf16.msra.mxu0 %v436
    %600 = vmatprep.subr.bf16.mxu0 0
    %601 = vmatpush1.bf16.msra.mxu0 %v437
    %602 = vmatprep.subr.bf16.mxu0 0
    %603 = vmatpush1.bf16.msra.mxu0 %v438
    %604 = vmatprep.subr.bf16.mxu0 0
    %605 = vmatpush1.bf16.msra.mxu0 %v439
    %606 = vmatprep.subr.bf16.mxu0 0
    %607 = vmatpush1.bf16.msra.mxu0 %v440
    %608 = vmatprep.subr.bf16.mxu0 0
    %609 = vmatpush1.bf16.msra.mxu0 %v441
    %610 = vmatprep.subr.bf16.mxu0 0
    %611 = vmatpush1.bf16.msra.mxu0 %v442
    %612 = vmatprep.subr.bf16.mxu0 0
    %613 = vmatpush1.bf16.msra.mxu0 %v443
    %614 = vmatprep.subr.bf16.mxu0 0
    %615 = vmatpush1.bf16.msra.mxu0 %v444
    %616 = vmatprep.subr.bf16.mxu0 0
    %617 = vmatpush1.bf16.msra.mxu0 %v445
    %618 = vmatprep.subr.bf16.mxu0 0
    %619 = vmatpush1.bf16.msra.mxu0 %v446
    %620 = vmatprep.subr.bf16.mxu0 0
    %621 = vmatpush1.bf16.msra.mxu0 %v447
    %622 = vmatprep.subr.bf16.mxu0 0
    %623 = vmatpush1.bf16.msra.mxu0 %v448
    %624 = vmatprep.subr.bf16.mxu0 0
    %625 = vmatpush1.bf16.msra.mxu0 %v449
    %626 = vmatprep.subr.bf16.mxu0 0
    %627 = vmatpush1.bf16.msra.mxu0 %v450
    %628 = vmatprep.subr.bf16.mxu0 0
    %629 = vmatpush1.bf16.msra.mxu0 %v451
    %630 = vmatprep.mubr.bf16.mxu0 %v193
    %631 = vmatmul.mubr.bf16.gmra.mrb[0].mxu0 %v192
    %v632 = vpop.f32.mrb[0].mxu0
    %v633 = vadd.f32 %v584, %v632
    %v634 = vpop.f32.mrb[0].mxu0
    %v635 = vpop.f32.mrb[0].mxu0
    %v636 = vadd.f32 %v587, %v635
    %v637 = vpop.f32.mrb[0].mxu0
    %638 = vmatprep.mubr.bf16.mxu0 %v199
    %639 = vmatmul.mubr.bf16.gmra.mrb[0].mxu0 %v198
    %v640 = vpop.f32.mrb[0].mxu0
    %v641 = vadd.f32 %v592, %v640
    %v642 = vpop.f32.mrb[0].mxu0
    %v643 = vpop.f32.mrb[0].mxu0
    %v644 = vadd.f32 %v595, %v643
    %v645 = vpop.f32.mrb[0].mxu0
    %646 = vdwg.mxu0
    %v647 = vpack.c.bf16 %v636, %v633
    %v648 = vpack.c.bf16 %v644, %v641
    %v651 = vunpack.c.l.b16 %v647
    %v652 = vunpack.c.h.b16 %v647
    %v653 = vunpack.c.l.b16 %v648
    %v654 = vunpack.c.h.b16 %v648
    %v655 = vpack.c.b16 %v651, %v651
    %v656 = vpack.c.b16 %v652, %v652
    %v657 = vpack.c.b16 %v653, %v653
    %v658 = vpack.c.b16 %v654, %v654
    %663 = vst [vmem:[#allocation7] sm:$0xf] %v655
    %664 = vst [vmem:[#allocation7 + $0x4] sm:$0xf] %v656
    %665 = vst [vmem:[#allocation7 + $0x8] sm:$0xf] %v657
    %666 = vst [vmem:[#allocation7 + $0xc] sm:$0xf] %v658
    %v667 = vadd.f32 %v633, %v636
    %v668 = vadd.f32 %v667, %v641
    %v669 = vadd.f32 %v668, %v644
    %v670 = vrot.slane %v669, 4
    %v671 = vadd.f32 %v669, %v670
    %v672 = vrot.slane %v671, 2
    %v673 = vadd.f32 %v671, %v672
    %v674 = vrot.slane %v673, 1
    %v675 = vadd.f32 %v673, %v674
    %v676 = vmul.f32 %v633, %v633
    %v677 = vmul.f32 %v636, %v636
    %v678 = vmul.f32 %v641, %v641
    %v679 = vmul.f32 %v644, %v644
    %v680 = vadd.f32 %v676, %v677
    %v681 = vadd.f32 %v680, %v678
    %v682 = vadd.f32 %v681, %v679
    %v683 = vrot.slane %v682, 4
    %v684 = vadd.f32 %v682, %v683
    %v685 = vrot.slane %v684, 2
    %v686 = vadd.f32 %v684, %v685
    %v687 = vrot.slane %v686, 1
    %v688 = vadd.f32 %v686, %v687
    %v689 = vlaneseq
    %v690 = vshrl.u32 %v689, 7
    %vm691 = vcmp.eq.s32.totalorder %v690, 0
    %v692 = vsel %vm691, %v675, 0.0
    %vm693 = vcmp.eq.s32.totalorder %v690, 1
    %v694 = vsel %vm693, %v688, 0.0
    %v695 = vadd.f32 %v692, %v694
    %696 = vst [vmem:[#allocation8] sm:$0xff] %v695
    // Predicated region
    $region18: #{tpu_custom_call.1} parent=1 // pred_check
      _
    $region19: #{tpu_custom_call.1} parent=1 // pred_check_branch
      %698 = sbr.rel (0) target = $region21
    $region20: #{tpu_custom_call.1} parent=1 // pred_region
      %s700 = ssub.s32 256, 256
      %701 = vsyncadd [#allocation4], %s700
      %s702 = sshll.u32 [#allocation7], 4
      %s703 = int_to_ptr.vmem [resolvable:$true] %s702
      %708 = dma.vmem_to_hbm [thread:$0]  %s703, 256, %s2, [#allocation4], 64, 64, 4
    $region21: #{tpu_custom_call.1} parent=1 // pred_fallthru
      _
    // Predicated region
    $region22: #{tpu_custom_call.1} parent=1 // pred_check
      _
    $region23: #{tpu_custom_call.1} parent=1 // pred_check_branch
      %710 = sbr.rel (0) target = $region25
    $region24: #{tpu_custom_call.1} parent=1 // pred_region
      %s712 = ssub.s32 128, 128
      %713 = vsyncadd [#allocation9], %s712
      %s715 = sshll.u32 [#allocation8], 4
      %s716 = int_to_ptr.vmem [resolvable:$true] %s715
      %718 = dma.vmem_to_hbm [thread:$0]  %s716, 128, %s3, [#allocation9]
    $region25: #{tpu_custom_call.1} parent=1 // pred_fallthru
      _
    // Predicated region
    $region26: #{tpu_custom_call.1} parent=1 // pred_check
      _
    $region27: #{tpu_custom_call.1} parent=1 // pred_check_branch
      %720 = sbr.rel (0) target = $region29
    $region28: #{tpu_custom_call.1} parent=1 // pred_region
      %721 = dma.done [#allocation4], 256
    $region29: #{tpu_custom_call.1} parent=1 // pred_fallthru
      _
    // Predicated region
    $region30: #{tpu_custom_call.1} parent=1 // pred_check
      _
    $region31: #{tpu_custom_call.1} parent=1 // pred_check_branch
      %723 = sbr.rel (0) target = $region33
    $region32: #{tpu_custom_call.1} parent=1 // pred_region
      %724 = dma.done [#allocation9], 128
    $region33: #{tpu_custom_call.1} parent=1 // pred_fallthru
      _
    %725 = vsyncpa [#allocation3], 1
    %726 = vsyncpa [#allocation6], 1
    %727 = vsyncpa [#allocation4], 1
    %728 = vsyncpa [#allocation9], 1

</llo_original>
